<compile_context>
chip_gen: v7x
topology: tpu7x:2x2x1
jax: 0.10.0
libtpu: 0.0.40
codegen_flags: <defaults>
</compile_context>

<pallas_src>
import math

import jax
import jax.numpy as jnp
from jax.experimental import pallas as pl
from jax.experimental.pallas import tpu as pltpu


def _round_up(x, m):
    return (x + m - 1) // m * m


def _cdiv(a, b):
    return (a + b - 1) // b


def dqn_kernel(x_ref, w1_ref, b1_ref, w2_ref, b2_ref, out_ref):
    num_actions = out_ref.shape[-1]            # true A (un-padded output block)
    # fc1 on the MXU (operands in compute dtype, f32 accumulation).
    x = x_ref[...].astype(w1_ref.dtype)
    h = jnp.dot(x, w1_ref[...], preferred_element_type=jnp.float32)
    # Bias + ReLU epilogue in f32 on the VPU.
    h = jnp.maximum(h + b1_ref[...], 0.0)
    # fc2 on the MXU: lane-dense (TB, A_pad=128) matmul, then slice to the true
    # A columns before the store so the HBM writeback carries no zero padding.
    h = h.astype(w2_ref.dtype)
    out = jnp.dot(h, w2_ref[...], preferred_element_type=jnp.float32)
    out_ref[...] = (out[:, :num_actions] + b2_ref[...]).astype(out_ref.dtype)


def prepare_params(w1, b1, w2, b2, *, compute_dtype=jnp.bfloat16):
    """One-time (per parameter update) padding + cast of the fc weights.

    Weights are stored [in, out] (transpose of PyTorch's [out, in]) so the
    kernel does plain row-major matmuls: out = relu(x @ W1 + b1) @ W2 + b2.
    Zero padding is exact: ReLU(0)=0 and the padded H columns of W2 are zero
    rows; the padded A columns never reach HBM (sliced in-kernel).
    """
    in_features, fc1_dims = w1.shape
    num_actions = w2.shape[1]
    h_pad = _round_up(fc1_dims, 128)
    a_pad = _round_up(num_actions, 128)

    w1_p = jnp.pad(w1, ((0, 0), (0, h_pad - fc1_dims))).astype(compute_dtype)
    b1_p = jnp.pad(b1.reshape(1, fc1_dims),
                   ((0, 0), (0, h_pad - fc1_dims))).astype(jnp.float32)
    w2_p = jnp.pad(w2, ((0, h_pad - fc1_dims),
                        (0, a_pad - num_actions))).astype(compute_dtype)
    b2_p = b2.reshape(1, num_actions).astype(jnp.float32)   # kept un-padded
    return w1_p, b1_p, w2_p, b2_p


def deep_q_network_forward(state, params, *, block_b=1024):
    """state: [B, F] f32; params from prepare_params(). Returns [B, A] f32."""
    w1_p, b1_p, w2_p, b2_p = params
    B, F = state.shape
    assert w1_p.shape[0] == F
    H_pad = w1_p.shape[1]
    A_pad = w2_p.shape[1]
    A = b2_p.shape[1]

    # Batch tile: multiple of the f32 sublane count (8), capped by block_b,
    # and capped at ~half the batch so there are >=2 tiles for v7x's 2 TCs.
    B_pad8 = _round_up(B, 8)
    half = _round_up(_cdiv(B_pad8, 2), 8)
    TB = min(_round_up(block_b, 8), max(8, half))
    B_pad = _round_up(B_pad8, TB)

    state_p = state.astype(jnp.float32)
    if B_pad != B:
        state_p = jnp.pad(state_p, ((0, B_pad - B), (0, 0)))

    out = pl.pallas_call(
        dqn_kernel,
        out_shape=jax.ShapeDtypeStruct((B_pad, A), jnp.float32),
        grid=(B_pad // TB,),
        in_specs=[
            pl.BlockSpec((TB, F), lambda i: (i, 0)),         # batch-tiled state
            pl.BlockSpec((F, H_pad), lambda i: (0, 0)),      # W1 (resident)
            pl.BlockSpec((1, H_pad), lambda i: (0, 0)),      # b1
            pl.BlockSpec((H_pad, A_pad), lambda i: (0, 0)),  # W2 (resident)
            pl.BlockSpec((1, A), lambda i: (0, 0)),          # b2 (true A)
        ],
        out_specs=pl.BlockSpec((TB, A), lambda i: (i, 0)),   # narrow writeback
        compiler_params=pltpu.CompilerParams(
            dimension_semantics=("parallel",),   # shard batch tiles on v7x 2xTC
        ),
    )(state_p, w1_p, b1_p, w2_p, b2_p)

    if B_pad != B:
        out = out[:B]
    return out


def init_params(key, in_features, fc1_dims, num_actions):
    """Deterministic init mirroring nn.Linear default: U(-1/sqrt(fan_in), ...)."""
    k1, k2, k3, k4 = jax.random.split(key, 4)
    bound1 = 1.0 / math.sqrt(in_features)
    bound2 = 1.0 / math.sqrt(fc1_dims)
    # Stored as [in, out] (transpose of PyTorch's [out, in]).
    w1 = jax.random.uniform(k1, (in_features, fc1_dims), jnp.float32, -bound1, bound1)
    b1 = jax.random.uniform(k2, (1, fc1_dims), jnp.float32, -bound1, bound1)
    w2 = jax.random.uniform(k3, (fc1_dims, num_actions), jnp.float32, -bound2, bound2)
    b2 = jax.random.uniform(k4, (1, num_actions), jnp.float32, -bound2, bound2)
    return w1, b1, w2, b2


if __name__ == "__main__":
    # Module config: input_dims is a sequence; fc1 in_features = len(input_dims).
    input_dims = [0.0] * 8          # len(input_dims) == 8 -> in_features = 8
    fc1_dims = 32
    num_actions = 4
    batch = 2

    key = jax.random.PRNGKey(0)
    k_state, k_params, k_big, k_rag = jax.random.split(key, 4)
    state = jax.random.normal(k_state, (batch, len(input_dims)), jnp.float32)
    w1, b1, w2, b2 = init_params(k_params, len(input_dims), fc1_dims, num_actions)

    # Plain-JAX f32 reference (same math as the PyTorch forward).
    def ref_fwd(s):
        return jnp.maximum(s @ w1 + b1, 0.0) @ w2 + b2

    # Hoisted, once-per-update parameter prep (not per forward).
    params_f32 = prepare_params(w1, b1, w2, b2, compute_dtype=jnp.float32)
    params_bf16 = prepare_params(w1, b1, w2, b2, compute_dtype=jnp.bfloat16)

    # 1) Exact-semantics check: f32 compute path, tight tolerance.
    out_f32 = deep_q_network_forward(state, params_f32)
    jax.block_until_ready(out_f32)
    assert out_f32.shape == (batch, num_actions)
    assert jnp.allclose(out_f32, ref_fwd(state), atol=1e-5, rtol=1e-5)

    # 2) Default fast path: bf16 MXU operands, f32 accumulation/epilogue.
    out_bf16 = deep_q_network_forward(state, params_bf16)
    jax.block_until_ready(out_bf16)
    assert out_bf16.shape == (batch, num_actions)
    assert jnp.allclose(out_bf16, ref_fwd(state), atol=5e-2, rtol=5e-2)

    # 3) Batched eval path: >=2 grid tiles (exercises pipelining / megacore).
    big_state = jax.random.normal(k_big, (512, len(input_dims)), jnp.float32)
    out_big = deep_q_network_forward(big_state, params_bf16, block_b=1024)
    jax.block_until_ready(out_big)
    assert out_big.shape == (512, num_actions)
    assert jnp.allclose(out_big, ref_fwd(big_state), atol=5e-2, rtol=5e-2)

    # 4) Ragged batch (not a multiple of 8): bounded padding, sliced result.
    rag_state = jax.random.normal(k_rag, (300, len(input_dims)), jnp.float32)
    out_rag = deep_q_network_forward(rag_state, params_bf16)
    jax.block_until_ready(out_rag)
    assert out_rag.shape == (300, num_actions)
    assert jnp.allclose(out_rag, ref_fwd(rag_state), atol=5e-2, rtol=5e-2)

    print("KERNEL_OK")
</pallas_src>

<mosaic_0001>
module attributes {stable_mosaic.version = 11 : i64} {
  func.func @dqn_kernel(%arg0: i32, %arg1: memref<8x8xf32, #tpu.memory_space<vmem>>, %arg2: memref<8x128xf32, #tpu.memory_space<vmem>>, %arg3: memref<1x128xf32, #tpu.memory_space<vmem>>, %arg4: memref<128x128xf32, #tpu.memory_space<vmem>>, %arg5: memref<1x4xf32, #tpu.memory_space<vmem>>, %arg6: memref<8x4xf32, #tpu.memory_space<vmem>>) attributes {dimension_semantics = [#tpu.dimension_semantics<parallel>], iteration_bounds = array<i64: 1>, scalar_prefetch = 0 : i64, scratch_operands = 0 : i64, tpu.core_type = #tpu.core_type<tc>, window_params = [{transform_indices = @transform_0, window_bounds = array<i64: 8, 8>}, {pipeline_mode = #tpu.pipeline_mode<synchronous>, transform_indices = @transform_1, window_bounds = array<i64: 8, 128>}, {pipeline_mode = #tpu.pipeline_mode<synchronous>, transform_indices = @transform_2, window_bounds = array<i64: 1, 128>}, {pipeline_mode = #tpu.pipeline_mode<synchronous>, transform_indices = @transform_3, window_bounds = array<i64: 128, 128>}, {pipeline_mode = #tpu.pipeline_mode<synchronous>, transform_indices = @transform_4, window_bounds = array<i64: 1, 4>}, {transform_indices = @transform_5, window_bounds = array<i64: 8, 4>}]} {
    %c0 = arith.constant 0 : index
    %c0_0 = arith.constant 0 : index
    %0 = vector.load %arg1[%c0, %c0_0] : memref<8x8xf32, #tpu.memory_space<vmem>>, vector<8x8xf32>
    %c0_1 = arith.constant 0 : index
    %c0_2 = arith.constant 0 : index
    %1 = vector.load %arg2[%c0_1, %c0_2] : memref<8x128xf32, #tpu.memory_space<vmem>>, vector<8x128xf32>
    %cst = arith.constant dense<0.000000e+00> : vector<8x128xf32>
    %2 = tpu.matmul %0, %1, %cst {dimension_numbers = #tpu.dot_dimension_numbers<[1], [0], [0], [1], [0, 0, 1, 1], [], []>} : vector<8x8xf32>, vector<8x128xf32>, vector<8x128xf32> -> vector<8x128xf32>
    %c0_3 = arith.constant 0 : index
    %c0_4 = arith.constant 0 : index
    %3 = vector.load %arg3[%c0_3, %c0_4] : memref<1x128xf32, #tpu.memory_space<vmem>>, vector<1x128xf32>
    %4 = vector.broadcast %3 : vector<1x128xf32> to vector<8x128xf32>
    %5 = arith.addf %2, %4 : vector<8x128xf32>
    %cst_5 = arith.constant 0.000000e+00 : f32
    %6 = vector.broadcast %cst_5 : f32 to vector<8x128xf32>
    %7 = arith.maximumf %5, %6 : vector<8x128xf32>
    %c0_6 = arith.constant 0 : index
    %c0_7 = arith.constant 0 : index
    %8 = vector.load %arg4[%c0_6, %c0_7] : memref<128x128xf32, #tpu.memory_space<vmem>>, vector<128x128xf32>
    %cst_8 = arith.constant dense<0.000000e+00> : vector<8x128xf32>
    %9 = tpu.matmul %7, %8, %cst_8 {dimension_numbers = #tpu.dot_dimension_numbers<[1], [0], [0], [1], [0, 0, 1, 1], [], []>} : vector<8x128xf32>, vector<128x128xf32>, vector<8x128xf32> -> vector<8x128xf32>
    %10 = vector.extract_strided_slice %9 {offsets = [0, 0], sizes = [8, 4], strides = [1, 1]} : vector<8x128xf32> to vector<8x4xf32>
    %c0_9 = arith.constant 0 : index
    %c0_10 = arith.constant 0 : index
    %11 = vector.load %arg5[%c0_9, %c0_10] : memref<1x4xf32, #tpu.memory_space<vmem>>, vector<1x4xf32>
    %12 = vector.broadcast %11 : vector<1x4xf32> to vector<8x4xf32>
    %13 = arith.addf %10, %12 : vector<8x4xf32>
    %c0_11 = arith.constant 0 : index
    %c0_12 = arith.constant 0 : index
    %14 = vector.load %arg6[%c0_11, %c0_12] : memref<8x4xf32, #tpu.memory_space<vmem>>, vector<8x4xf32>
    tpu.vector_store %arg6[%c0_11, %c0_12], %13 {strides = array<i32>} : memref<8x4xf32, #tpu.memory_space<vmem>>, vector<8x4xf32>,
    return
  }
  func.func @transform_0(%arg0: i32) -> (i32, i32) {
    %c0_i32 = arith.constant 0 : i32
    %c0_i32_0 = arith.constant 0 : i32
    return %arg0, %c0_i32 : i32, i32
  }
  func.func @transform_1(%arg0: i32) -> (i32, i32) {
    %c0_i32 = arith.constant 0 : i32
    %c0_i32_0 = arith.constant 0 : i32
    %c0_i32_1 = arith.constant 0 : i32
    return %c0_i32, %c0_i32_0 : i32, i32
  }
  func.func @transform_2(%arg0: i32) -> (i32, i32) {
    %c0_i32 = arith.constant 0 : i32
    %c0_i32_0 = arith.constant 0 : i32
    %c0_i32_1 = arith.constant 0 : i32
    return %c0_i32, %c0_i32_0 : i32, i32
  }
  func.func @transform_3(%arg0: i32) -> (i32, i32) {
    %c0_i32 = arith.constant 0 : i32
    %c0_i32_0 = arith.constant 0 : i32
    %c0_i32_1 = arith.constant 0 : i32
    return %c0_i32, %c0_i32_0 : i32, i32
  }
  func.func @transform_4(%arg0: i32) -> (i32, i32) {
    %c0_i32 = arith.constant 0 : i32
    %c0_i32_0 = arith.constant 0 : i32
    %c0_i32_1 = arith.constant 0 : i32
    return %c0_i32, %c0_i32_0 : i32, i32
  }
  func.func @transform_5(%arg0: i32) -> (i32, i32) {
    %c0_i32 = arith.constant 0 : i32
    %c0_i32_0 = arith.constant 0 : i32
    return %arg0, %c0_i32 : i32, i32
  }
}

</mosaic_0001>

<llo_original>
// kernel: tpu_custom_call.1
$region0: #{tpu_custom_call.1}
  #allocation0 [shape = 'u32[]', space=smem, size = 0x4, offset = 0x4, fixed_abs, tag = 'smem constant byte address 0x4 - core index']
  #allocation1 [shape = 'u32[144,128]{1,0:T(1,128)}', space=vmem, size = 0x12000, scoped, tag = 'internal scratch']
  %s0 = inlined_call_operand.hbm [shape: f32[8,8], index: 0, kind: input, shape index: {}]
  %s1 = inlined_call_operand.hbm [shape: f32[8,128], index: 1, kind: input, shape index: {}]
  %s2 = inlined_call_operand.vmem [shape: f32[1,128], index: 2, kind: input, shape index: {}]
  %s3 = inlined_call_operand.hbm [shape: f32[128,128], index: 3, kind: input, shape index: {}]
  %s4 = inlined_call_operand.vmem [shape: f32[1,4], index: 4, kind: input, shape index: {}]
  %s5 = inlined_call_operand.vmem [shape: f32[8,4], index: 5, kind: output, shape index: {}]
  %s6 = sld [smem:[#allocation0]]
  $region42: #{tpu_custom_call.1} parent=0
    _
  %s8 = ssub.s32 1, %s6
  %s9 = scalar_select 0, %s8, %s6
  $region1: #{tpu_custom_call.1} parent=0
    #allocation2 [shape = 'u8[4096]{0}', space=vmem, size = 0x1000, scoped, tag = 'input window, operand 0, single buffered']
    #allocation3 [shape = 's32[1]{0}', space=sflag, size = 0x4, scoped, tag = 'scoped memory for tpu_custom_call.1']
    #allocation4 [shape = 'u8[4096]{0}', space=vmem, size = 0x1000, scoped, tag = 'input window, operand 1, single buffered']
    #allocation5 [shape = 's32[1]{0}', space=sflag, size = 0x4, scoped, tag = 'scoped memory for tpu_custom_call.1']
    #allocation6 [shape = 'u8[65536]{0}', space=vmem, size = 0x10000, scoped, tag = 'input window, operand 3, single buffered']
    %10 = vsyncpa [#allocation3], 0
    %11 = vsyncpa [#allocation5], 0
    // Predicated region
    $region2: #{tpu_custom_call.1} parent=1 // pred_check
      _
    $region3: #{tpu_custom_call.1} parent=1 // pred_check_branch
      %13 = sbr.rel (0) target = $region5
    $region4: #{tpu_custom_call.1} parent=1 // pred_region
      %s15 = ssub.s32 128, 128
      %16 = vsyncadd [#allocation3], %s15
      %s18 = sshll.u32 [#allocation2], 4
      %s19 = int_to_ptr.vmem [resolvable:$true] %s18
      %21 = dma.hbm_to_vmem [thread:$0]  %s0, 128, %s19, [#allocation3]
    $region5: #{tpu_custom_call.1} parent=1 // pred_fallthru
      _
    // Predicated region
    $region6: #{tpu_custom_call.1} parent=1 // pred_check
      _
    $region7: #{tpu_custom_call.1} parent=1 // pred_check_branch
      %23 = sbr.rel (0) target = $region9
    $region8: #{tpu_custom_call.1} parent=1 // pred_region
      %s25 = ssub.s32 128, 128
      %26 = vsyncadd [#allocation5], %s25
      %s28 = sshll.u32 [#allocation4], 4
      %s29 = int_to_ptr.vmem [resolvable:$true] %s28
      %31 = dma.hbm_to_vmem [thread:$0]  %s1, 128, %s29, [#allocation5]
    $region9: #{tpu_custom_call.1} parent=1 // pred_fallthru
      _
    // Predicated region
    $region10: #{tpu_custom_call.1} parent=1 // pred_check
      _
    $region11: #{tpu_custom_call.1} parent=1 // pred_check_branch
      %33 = sbr.rel (0) target = $region13
    $region12: #{tpu_custom_call.1} parent=1 // pred_region
      _
    $region13: #{tpu_custom_call.1} parent=1 // pred_fallthru
      _
    // Predicated region
    $region14: #{tpu_custom_call.1} parent=1 // pred_check
      _
    $region15: #{tpu_custom_call.1} parent=1 // pred_check_branch
      %35 = sbr.rel (0) target = $region17
    $region16: #{tpu_custom_call.1} parent=1 // pred_region
      %s37 = ssub.s32 2048, 2048
      %38 = vsyncadd [#allocation5], %s37
      %s39 = sshll.u32 [#allocation6], 4
      %s40 = int_to_ptr.vmem [resolvable:$true] %s39
      %45 = dma.hbm_to_vmem [thread:$0]  %s3, 2048, %s40, [#allocation5], 128, 128, 8
    $region17: #{tpu_custom_call.1} parent=1 // pred_fallthru
      _
    // Predicated region
    $region18: #{tpu_custom_call.1} parent=1 // pred_check
      _
    $region19: #{tpu_custom_call.1} parent=1 // pred_check_branch
      %47 = sbr.rel (0) target = $region21
    $region20: #{tpu_custom_call.1} parent=1 // pred_region
      _
    $region21: #{tpu_custom_call.1} parent=1 // pred_fallthru
      _
    // Predicated region
    $region22: #{tpu_custom_call.1} parent=1 // pred_check
      _
    $region23: #{tpu_custom_call.1} parent=1 // pred_check_branch
      %49 = sbr.rel (0) target = $region25
    $region24: #{tpu_custom_call.1} parent=1 // pred_region
      %50 = dma.done [#allocation3], 128
    $region25: #{tpu_custom_call.1} parent=1 // pred_fallthru
      _
    // Predicated region
    $region26: #{tpu_custom_call.1} parent=1 // pred_check
      _
    $region27: #{tpu_custom_call.1} parent=1 // pred_check_branch
      %52 = sbr.rel (0) target = $region29
    $region28: #{tpu_custom_call.1} parent=1 // pred_region
      %53 = dma.done [#allocation5], 128
    $region29: #{tpu_custom_call.1} parent=1 // pred_fallthru
      _
    // Predicated region
    $region30: #{tpu_custom_call.1} parent=1 // pred_check
      _
    $region31: #{tpu_custom_call.1} parent=1 // pred_check_branch
      %55 = sbr.rel (0) target = $region33
    $region32: #{tpu_custom_call.1} parent=1 // pred_region
      %56 = dma.done [#allocation5], 2048
    $region33: #{tpu_custom_call.1} parent=1 // pred_fallthru
      _
    %v57 = vld [vmem:[#allocation2] sm:$0xff]
    %v58 = vld [vmem:[#allocation4] sm:$0xff]
    %v59 = vld [vmem:[%s2] sm:$0x1]
    %v61 = vlaneseq
    %v62 = vshrl.u32 %v61, 7
    %v63 = vsub.s32 0, %v62
    %v64 = vrot.slane %v59, %v63
    %vm66 = vcmask 64512
    %v68 = vsel %vm66, %v57, 0
    %70 = vmatprep.subr.mxu0 0.0
    %71 = vmatpush1.msra.mxu0 %v58
    %72 = vmatprep.subr.mxu0 0.0
    %73 = vmatpush1.msra.mxu0 0.0
    %74 = vmatprep.subr.mxu0 0.0
    %75 = vmatpush1.msra.mxu0 0.0
    %76 = vmatprep.subr.mxu0 0.0
    %77 = vmatpush1.msra.mxu0 0.0
    %78 = vmatprep.subr.mxu0 0.0
    %79 = vmatpush1.msra.mxu0 0.0
    %80 = vmatprep.subr.mxu0 0.0
    %81 = vmatpush1.msra.mxu0 0.0
    %82 = vmatprep.subr.mxu0 0.0
    %83 = vmatpush1.msra.mxu0 0.0
    %84 = vmatprep.subr.mxu0 0.0
    %85 = vmatpush1.msra.mxu0 0.0
    %86 = vmatprep.subr.mxu0 0.0
    %87 = vmatpush1.msra.mxu0 0.0
    %88 = vmatprep.subr.mxu0 0.0
    %89 = vmatpush1.msra.mxu0 0.0
    %90 = vmatprep.subr.mxu0 0.0
    %91 = vmatpush1.msra.mxu0 0.0
    %92 = vmatprep.subr.mxu0 0.0
    %93 = vmatpush1.msra.mxu0 0.0
    %94 = vmatprep.subr.mxu0 0.0
    %95 = vmatpush1.msra.mxu0 0.0
    %96 = vmatprep.subr.mxu0 0.0
    %97 = vmatpush1.msra.mxu0 0.0
    %98 = vmatprep.subr.mxu0 0.0
    %99 = vmatpush1.msra.mxu0 0.0
    %100 = vmatprep.subr.mxu0 0.0
    %101 = vmatpush1.msra.mxu0 0.0
    %102 = vmatprep.subr.mxu0 0.0
    %103 = vmatpush1.msra.mxu0 0.0
    %104 = vmatprep.subr.mxu0 0.0
    %105 = vmatpush1.msra.mxu0 0.0
    %106 = vmatprep.subr.mxu0 0.0
    %107 = vmatpush1.msra.mxu0 0.0
    %108 = vmatprep.subr.mxu0 0.0
    %109 = vmatpush1.msra.mxu0 0.0
    %110 = vmatprep.subr.mxu0 0.0
    %111 = vmatpush1.msra.mxu0 0.0
    %112 = vmatprep.subr.mxu0 0.0
    %113 = vmatpush1.msra.mxu0 0.0
    %114 = vmatprep.subr.mxu0 0.0
    %115 = vmatpush1.msra.mxu0 0.0
    %116 = vmatprep.subr.mxu0 0.0
    %117 = vmatpush1.msra.mxu0 0.0
    %118 = vmatprep.subr.mxu0 0.0
    %119 = vmatpush1.msra.mxu0 0.0
    %120 = vmatprep.subr.mxu0 0.0
    %121 = vmatpush1.msra.mxu0 0.0
    %122 = vmatprep.subr.mxu0 0.0
    %123 = vmatpush1.msra.mxu0 0.0
    %124 = vmatprep.subr.mxu0 0.0
    %125 = vmatpush1.msra.mxu0 0.0
    %126 = vmatprep.subr.mxu0 0.0
    %127 = vmatpush1.msra.mxu0 0.0
    %128 = vmatprep.subr.mxu0 0.0
    %129 = vmatpush1.msra.mxu0 0.0
    %130 = vmatprep.subr.mxu0 0.0
    %131 = vmatpush1.msra.mxu0 0.0
    %132 = vmatprep.subr.mxu0 0.0
    %133 = vmatpush1.msra.mxu0 0.0
    %134 = vmatprep.mubr.f32.mxu0 0.0
    %135 = vmatmul.mubr.f32.gmra.mrb[0].mxu0 %v68
    %v136 = vpop.f32.mrb[0].mxu0
    %v137 = vadd.f32 %v64, %v136
    %v138 = vpop.f32.mrb[0].mxu0
    %139 = vdwg.mxu0
    %v140 = vmax.f32 %v137, 0.0
    %v141 = vld [vmem:[#allocation6] sm:$0xff]
    %v142 = vld [vmem:[#allocation6 + $0x8] sm:$0xff]
    %v143 = vld [vmem:[#allocation6 + $0x10] sm:$0xff]
    %v144 = vld [vmem:[#allocation6 + $0x18] sm:$0xff]
    %v145 = vld [vmem:[#allocation6 + $0x20] sm:$0xff]
    %v146 = vld [vmem:[#allocation6 + $0x28] sm:$0xff]
    %v147 = vld [vmem:[#allocation6 + $0x30] sm:$0xff]
    %v148 = vld [vmem:[#allocation6 + $0x38] sm:$0xff]
    %v149 = vld [vmem:[#allocation6 + $0x40] sm:$0xff]
    %v150 = vld [vmem:[#allocation6 + $0x48] sm:$0xff]
    %v151 = vld [vmem:[#allocation6 + $0x50] sm:$0xff]
    %v152 = vld [vmem:[#allocation6 + $0x58] sm:$0xff]
    %v153 = vld [vmem:[#allocation6 + $0x60] sm:$0xff]
    %v154 = vld [vmem:[#allocation6 + $0x68] sm:$0xff]
    %v155 = vld [vmem:[#allocation6 + $0x70] sm:$0xff]
    %v156 = vld [vmem:[#allocation6 + $0x78] sm:$0xff]
    %157 = vmatprep.subr.mxu0 0.0
    %158 = vmatpush1.msra.mxu0 %v141
    %159 = vmatprep.subr.mxu0 0.0
    %160 = vmatpush1.msra.mxu0 %v142
    %161 = vmatprep.subr.mxu0 0.0
    %162 = vmatpush1.msra.mxu0 %v143
    %163 = vmatprep.subr.mxu0 0.0
    %164 = vmatpush1.msra.mxu0 %v144
    %165 = vmatprep.subr.mxu0 0.0
    %166 = vmatpush1.msra.mxu0 %v145
    %167 = vmatprep.subr.mxu0 0.0
    %168 = vmatpush1.msra.mxu0 %v146
    %169 = vmatprep.subr.mxu0 0.0
    %170 = vmatpush1.msra.mxu0 %v147
    %171 = vmatprep.subr.mxu0 0.0
    %172 = vmatpush1.msra.mxu0 %v148
    %173 = vmatprep.subr.mxu0 0.0
    %174 = vmatpush1.msra.mxu0 %v149
    %175 = vmatprep.subr.mxu0 0.0
    %176 = vmatpush1.msra.mxu0 %v150
    %177 = vmatprep.subr.mxu0 0.0
    %178 = vmatpush1.msra.mxu0 %v151
    %179 = vmatprep.subr.mxu0 0.0
    %180 = vmatpush1.msra.mxu0 %v152
    %181 = vmatprep.subr.mxu0 0.0
    %182 = vmatpush1.msra.mxu0 %v153
    %183 = vmatprep.subr.mxu0 0.0
    %184 = vmatpush1.msra.mxu0 %v154
    %185 = vmatprep.subr.mxu0 0.0
    %186 = vmatpush1.msra.mxu0 %v155
    %187 = vmatprep.subr.mxu0 0.0
    %188 = vmatpush1.msra.mxu0 %v156
    %189 = vmatprep.subr.mxu0 0.0
    %190 = vmatpush1.msra.mxu0 0.0
    %191 = vmatprep.subr.mxu0 0.0
    %192 = vmatpush1.msra.mxu0 0.0
    %193 = vmatprep.subr.mxu0 0.0
    %194 = vmatpush1.msra.mxu0 0.0
    %195 = vmatprep.subr.mxu0 0.0
    %196 = vmatpush1.msra.mxu0 0.0
    %197 = vmatprep.subr.mxu0 0.0
    %198 = vmatpush1.msra.mxu0 0.0
    %199 = vmatprep.subr.mxu0 0.0
    %200 = vmatpush1.msra.mxu0 0.0
    %201 = vmatprep.subr.mxu0 0.0
    %202 = vmatpush1.msra.mxu0 0.0
    %203 = vmatprep.subr.mxu0 0.0
    %204 = vmatpush1.msra.mxu0 0.0
    %205 = vmatprep.subr.mxu0 0.0
    %206 = vmatpush1.msra.mxu0 0.0
    %207 = vmatprep.subr.mxu0 0.0
    %208 = vmatpush1.msra.mxu0 0.0
    %209 = vmatprep.subr.mxu0 0.0
    %210 = vmatpush1.msra.mxu0 0.0
    %211 = vmatprep.subr.mxu0 0.0
    %212 = vmatpush1.msra.mxu0 0.0
    %213 = vmatprep.subr.mxu0 0.0
    %214 = vmatpush1.msra.mxu0 0.0
    %215 = vmatprep.subr.mxu0 0.0
    %216 = vmatpush1.msra.mxu0 0.0
    %217 = vmatprep.subr.mxu0 0.0
    %218 = vmatpush1.msra.mxu0 0.0
    %219 = vmatprep.subr.mxu0 0.0
    %220 = vmatpush1.msra.mxu0 0.0
    %221 = vmatprep.mubr.f32.mxu0 0.0
    %222 = vmatmul.mubr.f32.gmra.mrb[0].mxu0 %v140
    %v223 = vpop.f32.mrb[0].mxu0
    %v224 = vadd.f32 0.0, %v223
    %v225 = vpop.f32.mrb[0].mxu0
    %226 = vdwg.mxu0
    %v227 = vld [vmem:[%s4] sm:$0x1]
    %v229 = vlaneseq
    %v230 = vshrl.u32 %v229, 7
    %v231 = vsub.s32 0, %v230
    %v232 = vrot.slane %v227, %v231
    %v234 = vadd.f32 %v224, %v232
    %vm235 = vcmask 31744
    %236 = vst.msk [vmem:[%s5] sm:$0xff] %vm235, %v234
    // Predicated region
    $region34: #{tpu_custom_call.1} parent=1 // pred_check
      _
    $region35: #{tpu_custom_call.1} parent=1 // pred_check_branch
      %238 = sbr.rel (0) target = $region37
    $region36: #{tpu_custom_call.1} parent=1 // pred_region
      _
    $region37: #{tpu_custom_call.1} parent=1 // pred_fallthru
      _
    // Predicated region
    $region38: #{tpu_custom_call.1} parent=1 // pred_check
      _
    $region39: #{tpu_custom_call.1} parent=1 // pred_check_branch
      %240 = sbr.rel (0) target = $region41
    $region40: #{tpu_custom_call.1} parent=1 // pred_region
      _
    $region41: #{tpu_custom_call.1} parent=1 // pred_fallthru
      _
    %241 = vsyncpa [#allocation3], 1
    %242 = vsyncpa [#allocation5], 1

</llo_original>
